<compile_context>
chip_gen: v6e
topology: v6e:2x2x1
jax: 0.10.0
libtpu: 0.0.40
codegen_flags: <defaults>
</compile_context>

<pallas_src>
import functools

import jax
import jax.numpy as jnp
from jax import lax
from jax.experimental import pallas as pl
from jax.experimental.pallas import tpu as pltpu


def _round_up(x, m):
    return ((x + m - 1) // m) * m


def _mlp_kernel(ids_ref, emb_ref, w1_ref, b1_ref, w2_ref, b2_ref, out_ref, *, seq_len):
    """One grid step = one batch row.

    ids_ref : (1, Lp, 1)  int32  token ids (L padded; pad ids are 0)
    emb_ref : (Vp, Ep)    f32    embedding table (zero-padded, VMEM-resident)
    w1_ref  : (Ep, Hp)    f32    linear1 weight^T (zero-padded)
    b1_ref  : (1, Hp)     f32    linear1 bias (zero-padded)
    w2_ref  : (Hp, Cp)    f32    linear2 weight^T (zero-padded)
    b2_ref  : (1, Cp)     f32    linear2 bias (zero-padded)
    out_ref : (1, Lp, Cp) f32    softmax over the valid sequence positions
    """
    Lp = ids_ref.shape[1]
    Vp = emb_ref.shape[0]
    Cp = out_ref.shape[2]

    ids = ids_ref[0]                                          # (Lp, 1) int32

    # Embedding lookup: in-kernel one-hot (exact) -> one lane-dense MXU matmul.
    vocab_iota = lax.broadcasted_iota(jnp.int32, (Lp, Vp), 1)
    onehot = (vocab_iota == ids).astype(jnp.float32)          # (Lp, Vp)
    emb = jnp.dot(onehot, emb_ref[...], preferred_element_type=jnp.float32)  # (Lp, Ep)

    # Linear1 + ReLU.
    h = jnp.dot(emb, w1_ref[...], preferred_element_type=jnp.float32) + b1_ref[...]
    h = jnp.maximum(h, 0.0)                                   # (Lp, Hp)

    # Linear2.
    logits = jnp.dot(h, w2_ref[...], preferred_element_type=jnp.float32) + b2_ref[...]

    # Softmax over the sequence axis (torch dim=1), masking padded L rows so they
    # do not pollute the max / denominator.
    row = lax.broadcasted_iota(jnp.int32, (Lp, Cp), 0)
    valid = row < seq_len
    masked = jnp.where(valid, logits, -jnp.inf)
    m = jnp.max(masked, axis=0, keepdims=True)                # (1, Cp)
    e = jnp.where(valid, jnp.exp(logits - m), 0.0)            # (Lp, Cp)
    denom = jnp.sum(e, axis=0, keepdims=True)                 # (1, Cp)
    out_ref[0] = e * pl.reciprocal(denom, approx=True)        # EUP slot


def mlp_forward(token_ids, emb_table, w1, b1, w2, b2):
    """token_ids: (B, L) int32; params follow PyTorch shapes:
       emb_table (V, E), w1 (H, E), b1 (H,), w2 (C, H), b2 (C,)."""
    B, L = token_ids.shape
    V, E = emb_table.shape
    H = w1.shape[0]
    C = w2.shape[0]

    # Lane/sublane-friendly padded sizes.
    Lp = _round_up(L, 8)
    Vp = _round_up(V, 128)
    Ep = _round_up(E, 128)
    Hp = _round_up(H, 128)
    Cp = _round_up(C, 128)

    f32 = jnp.float32
    ids_p = jnp.pad(token_ids.astype(jnp.int32), ((0, 0), (0, Lp - L)))[..., None]  # (B, Lp, 1)
    emb_p = jnp.pad(emb_table.astype(f32), ((0, Vp - V), (0, Ep - E)))              # (Vp, Ep)
    w1t_p = jnp.pad(w1.T.astype(f32), ((0, Ep - E), (0, Hp - H)))                   # (Ep, Hp)
    b1_p = jnp.pad(b1.astype(f32), (0, Hp - H)).reshape(1, Hp)
    w2t_p = jnp.pad(w2.T.astype(f32), ((0, Hp - H), (0, Cp - C)))                   # (Hp, Cp)
    b2_p = jnp.pad(b2.astype(f32), (0, Cp - C)).reshape(1, Cp)

    kernel = functools.partial(_mlp_kernel, seq_len=L)

    out_padded = pl.pallas_call(
        kernel,
        out_shape=jax.ShapeDtypeStruct((B, Lp, Cp), f32),
        grid=(B,),
        in_specs=[
            pl.BlockSpec((1, Lp, 1), lambda b: (b, 0, 0)),   # token ids (per batch)
            pl.BlockSpec((Vp, Ep), lambda b: (0, 0)),        # embedding table (resident)
            pl.BlockSpec((Ep, Hp), lambda b: (0, 0)),        # W1^T (resident)
            pl.BlockSpec((1, Hp), lambda b: (0, 0)),         # b1 (resident)
            pl.BlockSpec((Hp, Cp), lambda b: (0, 0)),        # W2^T (resident)
            pl.BlockSpec((1, Cp), lambda b: (0, 0)),         # b2 (resident)
        ],
        out_specs=pl.BlockSpec((1, Lp, Cp), lambda b: (b, 0, 0)),
        compiler_params=pltpu.CompilerParams(
            dimension_semantics=("parallel",),
            vmem_limit_bytes=32 * 1024 * 1024,
        ),
    )(ids_p, emb_p, w1t_p, b1_p, w2t_p, b2_p)

    # Strip lane/sublane padding back to the logical shape.
    return out_padded[:, :L, :C]


def _reference(token_ids, emb_table, w1, b1, w2, b2):
    emb = emb_table[token_ids]                     # (B, L, E)
    h = jnp.maximum(emb @ w1.T + b1, 0.0)          # (B, L, H)
    logits = h @ w2.T + b2                         # (B, L, C)
    return jax.nn.softmax(logits, axis=1)          # softmax over dim=1 (seq axis)


if __name__ == "__main__":
    # Module hyperparameters (from the reference script).
    vocab_size, embedding_dim, hidden_dim, num_class = 8, 3, 5, 2
    B, L = 2, 4

    # Deterministic example inputs: the exact token ids from the PyTorch spec.
    token_ids = jnp.array([[0, 1, 2, 1], [4, 6, 6, 7]], dtype=jnp.int32)

    key = jax.random.PRNGKey(0)
    k_emb, k_w1, k_b1, k_w2, k_b2 = jax.random.split(key, 5)

    # Deterministic parameter init (shapes match nn.Embedding / nn.Linear).
    emb_table = jax.random.normal(k_emb, (vocab_size, embedding_dim), jnp.float32)
    w1 = jax.random.normal(k_w1, (hidden_dim, embedding_dim), jnp.float32) * 0.5
    b1 = jax.random.normal(k_b1, (hidden_dim,), jnp.float32) * 0.1
    w2 = jax.random.normal(k_w2, (num_class, hidden_dim), jnp.float32) * 0.5
    b2 = jax.random.normal(k_b2, (num_class,), jnp.float32) * 0.1

    probs = mlp_forward(token_ids, emb_table, w1, b1, w2, b2)
    probs = jax.block_until_ready(probs)

    ref = _reference(token_ids, emb_table, w1, b1, w2, b2)
    assert probs.shape == (B, L, num_class)
    # Tolerance accounts for the EUP approximate reciprocal in the softmax denominator.
    assert jnp.allclose(probs, ref, atol=1e-3, rtol=1e-3), (probs, ref)

    print("KERNEL_OK")
</pallas_src>

<mosaic_0001>
module attributes {stable_mosaic.version = 11 : i64} {
  func.func @_mlp_kernel(%arg0: i32, %arg1: memref<1x8x1xi32, #tpu.memory_space<vmem>>, %arg2: memref<128x128xf32, #tpu.memory_space<vmem>>, %arg3: memref<128x128xf32, #tpu.memory_space<vmem>>, %arg4: memref<1x128xf32, #tpu.memory_space<vmem>>, %arg5: memref<128x128xf32, #tpu.memory_space<vmem>>, %arg6: memref<1x128xf32, #tpu.memory_space<vmem>>, %arg7: memref<1x8x128xf32, #tpu.memory_space<vmem>>) attributes {dimension_semantics = [#tpu.dimension_semantics<parallel>], iteration_bounds = array<i64: 2>, scalar_prefetch = 0 : i64, scratch_operands = 0 : i64, tpu.core_type = #tpu.core_type<tc>, window_params = [{transform_indices = @transform_0, window_bounds = array<i64: 1, 8, 1>}, {pipeline_mode = #tpu.pipeline_mode<synchronous>, transform_indices = @transform_1, window_bounds = array<i64: 128, 128>}, {pipeline_mode = #tpu.pipeline_mode<synchronous>, transform_indices = @transform_2, window_bounds = array<i64: 128, 128>}, {pipeline_mode = #tpu.pipeline_mode<synchronous>, transform_indices = @transform_3, window_bounds = array<i64: 1, 128>}, {pipeline_mode = #tpu.pipeline_mode<synchronous>, transform_indices = @transform_4, window_bounds = array<i64: 128, 128>}, {pipeline_mode = #tpu.pipeline_mode<synchronous>, transform_indices = @transform_5, window_bounds = array<i64: 1, 128>}, {transform_indices = @transform_6, window_bounds = array<i64: 1, 8, 128>}]} {
    %c0 = arith.constant 0 : index
    %c0_0 = arith.constant 0 : index
    %c0_1 = arith.constant 0 : index
    %0 = vector.load %arg1[%c0, %c0_0, %c0_1] : memref<1x8x1xi32, #tpu.memory_space<vmem>>, vector<1x8x1xi32>
    %1 = vector.shape_cast %0 : vector<1x8x1xi32> to vector<8x1xi32>
    %2 = tpu.iota {dimensions = array<i32: 1>} : vector<8x128xi32>
    %3 = vector.broadcast %1 : vector<8x1xi32> to vector<8x128xi32>
    %4 = arith.cmpi eq, %2, %3 : vector<8x128xi32>
    %5 = arith.extui %4 : vector<8x128xi1> to vector<8x128xi32>
    %6 = arith.sitofp %5 : vector<8x128xi32> to vector<8x128xf32>
    %c0_2 = arith.constant 0 : index
    %c0_3 = arith.constant 0 : index
    %7 = vector.load %arg2[%c0_2, %c0_3] : memref<128x128xf32, #tpu.memory_space<vmem>>, vector<128x128xf32>
    %cst = arith.constant dense<0.000000e+00> : vector<8x128xf32>
    %8 = tpu.matmul %6, %7, %cst {dimension_numbers = #tpu.dot_dimension_numbers<[1], [0], [0], [1], [0, 0, 1, 1], [], []>} : vector<8x128xf32>, vector<128x128xf32>, vector<8x128xf32> -> vector<8x128xf32>
    %c0_4 = arith.constant 0 : index
    %c0_5 = arith.constant 0 : index
    %9 = vector.load %arg3[%c0_4, %c0_5] : memref<128x128xf32, #tpu.memory_space<vmem>>, vector<128x128xf32>
    %cst_6 = arith.constant dense<0.000000e+00> : vector<8x128xf32>
    %10 = tpu.matmul %8, %9, %cst_6 {dimension_numbers = #tpu.dot_dimension_numbers<[1], [0], [0], [1], [0, 0, 1, 1], [], []>} : vector<8x128xf32>, vector<128x128xf32>, vector<8x128xf32> -> vector<8x128xf32>
    %c0_7 = arith.constant 0 : index
    %c0_8 = arith.constant 0 : index
    %11 = vector.load %arg4[%c0_7, %c0_8] : memref<1x128xf32, #tpu.memory_space<vmem>>, vector<1x128xf32>
    %12 = vector.broadcast %11 : vector<1x128xf32> to vector<8x128xf32>
    %13 = arith.addf %10, %12 : vector<8x128xf32>
    %cst_9 = arith.constant 0.000000e+00 : f32
    %14 = vector.broadcast %cst_9 : f32 to vector<8x128xf32>
    %15 = arith.maximumf %13, %14 : vector<8x128xf32>
    %c0_10 = arith.constant 0 : index
    %c0_11 = arith.constant 0 : index
    %16 = vector.load %arg5[%c0_10, %c0_11] : memref<128x128xf32, #tpu.memory_space<vmem>>, vector<128x128xf32>
    %cst_12 = arith.constant dense<0.000000e+00> : vector<8x128xf32>
    %17 = tpu.matmul %15, %16, %cst_12 {dimension_numbers = #tpu.dot_dimension_numbers<[1], [0], [0], [1], [0, 0, 1, 1], [], []>} : vector<8x128xf32>, vector<128x128xf32>, vector<8x128xf32> -> vector<8x128xf32>
    %c0_13 = arith.constant 0 : index
    %c0_14 = arith.constant 0 : index
    %18 = vector.load %arg6[%c0_13, %c0_14] : memref<1x128xf32, #tpu.memory_space<vmem>>, vector<1x128xf32>
    %19 = vector.broadcast %18 : vector<1x128xf32> to vector<8x128xf32>
    %20 = arith.addf %17, %19 : vector<8x128xf32>
    %21 = tpu.iota {dimensions = array<i32: 0>} : vector<8x128xi32>
    %c4_i32 = arith.constant 4 : i32
    %22 = vector.broadcast %c4_i32 : i32 to vector<8x128xi32>
    %23 = arith.cmpi slt, %21, %22 : vector<8x128xi32>
    %cst_15 = arith.constant 0xFF800000 : f32
    %24 = vector.broadcast %cst_15 : f32 to vector<8x128xf32>
    %25 = arith.select %23, %20, %24 : vector<8x128xi1>, vector<8x128xf32>
    %cst_16 = arith.constant dense<0xFF800000> : vector<128xf32>
    %26 = vector.multi_reduction <maximumf>, %25, %cst_16 [0] : vector<8x128xf32> to vector<128xf32>
    %27 = vector.shape_cast %26 : vector<128xf32> to vector<1x128xf32>
    %28 = vector.broadcast %27 : vector<1x128xf32> to vector<8x128xf32>
    %29 = arith.subf %20, %28 : vector<8x128xf32>
    %30 = math.exp %29 : vector<8x128xf32>
    %cst_17 = arith.constant 0.000000e+00 : f32
    %31 = vector.broadcast %cst_17 : f32 to vector<8x128xf32>
    %32 = arith.select %23, %30, %31 : vector<8x128xi1>, vector<8x128xf32>
    %cst_18 = arith.constant dense<0.000000e+00> : vector<128xf32>
    %33 = vector.multi_reduction <add>, %32, %cst_18 [0] : vector<8x128xf32> to vector<128xf32>
    %34 = vector.shape_cast %33 : vector<128xf32> to vector<1x128xf32>
    %35 = tpu.reciprocal %34 {approx = true} : vector<1x128xf32> -> vector<1x128xf32>
    %36 = vector.broadcast %35 : vector<1x128xf32> to vector<8x128xf32>
    %37 = arith.mulf %32, %36 : vector<8x128xf32>
    %c0_19 = arith.constant 0 : index
    %c0_20 = arith.constant 0 : index
    %c0_21 = arith.constant 0 : index
    %38 = vector.load %arg7[%c0_19, %c0_20, %c0_21] : memref<1x8x128xf32, #tpu.memory_space<vmem>>, vector<1x8x128xf32>
    %39 = vector.shape_cast %38 : vector<1x8x128xf32> to vector<8x128xf32>
    %40 = vector.shape_cast %37 : vector<8x128xf32> to vector<1x8x128xf32>
    tpu.vector_store %arg7[%c0_19, %c0_20, %c0_21], %40 {strides = array<i32>} : memref<1x8x128xf32, #tpu.memory_space<vmem>>, vector<1x8x128xf32>,
    return
  }
  func.func @transform_0(%arg0: i32) -> (i32, i32, i32) {
    %c0_i32 = arith.constant 0 : i32
    %c0_i32_0 = arith.constant 0 : i32
    %c0_i32_1 = arith.constant 0 : i32
    return %arg0, %c0_i32, %c0_i32_0 : i32, i32, i32
  }
  func.func @transform_1(%arg0: i32) -> (i32, i32) {
    %c0_i32 = arith.constant 0 : i32
    %c0_i32_0 = arith.constant 0 : i32
    %c0_i32_1 = arith.constant 0 : i32
    return %c0_i32, %c0_i32_0 : i32, i32
  }
  func.func @transform_2(%arg0: i32) -> (i32, i32) {
    %c0_i32 = arith.constant 0 : i32
    %c0_i32_0 = arith.constant 0 : i32
    %c0_i32_1 = arith.constant 0 : i32
    return %c0_i32, %c0_i32_0 : i32, i32
  }
  func.func @transform_3(%arg0: i32) -> (i32, i32) {
    %c0_i32 = arith.constant 0 : i32
    %c0_i32_0 = arith.constant 0 : i32
    %c0_i32_1 = arith.constant 0 : i32
    return %c0_i32, %c0_i32_0 : i32, i32
  }
  func.func @transform_4(%arg0: i32) -> (i32, i32) {
    %c0_i32 = arith.constant 0 : i32
    %c0_i32_0 = arith.constant 0 : i32
    %c0_i32_1 = arith.constant 0 : i32
    return %c0_i32, %c0_i32_0 : i32, i32
  }
  func.func @transform_5(%arg0: i32) -> (i32, i32) {
    %c0_i32 = arith.constant 0 : i32
    %c0_i32_0 = arith.constant 0 : i32
    %c0_i32_1 = arith.constant 0 : i32
    return %c0_i32, %c0_i32_0 : i32, i32
  }
  func.func @transform_6(%arg0: i32) -> (i32, i32, i32) {
    %c0_i32 = arith.constant 0 : i32
    %c0_i32_0 = arith.constant 0 : i32
    %c0_i32_1 = arith.constant 0 : i32
    return %arg0, %c0_i32, %c0_i32_0 : i32, i32, i32
  }
}

</mosaic_0001>

<llo_original>
// kernel: tpu_custom_call.1
$region0: #{tpu_custom_call.1}
  #allocation0 [shape = 'u32[]', space=smem, size = 0x4, offset = 0x4, fixed_abs, tag = 'smem constant byte address 0x4 - core index']
  #allocation1 [shape = 'u32[144,128]{1,0:T(1,128)}', space=vmem, size = 0x12000, scoped, tag = 'internal scratch']
  %s0 = inlined_call_operand.vmem [shape: s32[2,8,1], index: 0, kind: input, shape index: {}]
  %s1 = inlined_call_operand.hbm [shape: f32[128,128], index: 1, kind: input, shape index: {}]
  %s2 = inlined_call_operand.hbm [shape: f32[128,128], index: 2, kind: input, shape index: {}]
  %s3 = inlined_call_operand.vmem [shape: f32[1,128], index: 3, kind: input, shape index: {}]
  %s4 = inlined_call_operand.hbm [shape: f32[128,128], index: 4, kind: input, shape index: {}]
  %s5 = inlined_call_operand.vmem [shape: f32[1,128], index: 5, kind: input, shape index: {}]
  %s6 = inlined_call_operand.hbm [shape: f32[2,8,128], index: 6, kind: output, shape index: {}]
  %s7 = sld [smem:[#allocation0]]
  $region69: #{tpu_custom_call.1} parent=0
    _
  %s9 = ssub.s32 1, %s7
  %s10 = scalar_select 0, %s9, %s7
  $region1: #{tpu_custom_call.1} parent=0
    #allocation2 [shape = 'u8[65536]{0}', space=vmem, size = 0x10000, scoped, tag = 'input window, operand 1, single buffered']
    #allocation3 [shape = 's32[2]{0}', space=sflag, size = 0x8, scoped, tag = 'scoped memory for tpu_custom_call.1']
    #allocation4 [shape = 's32[2]{0}', space=sflag, size = 0x8, scoped, tag = 'scoped memory for tpu_custom_call.1']
    #allocation5 [shape = 'u8[65536]{0}', space=vmem, size = 0x10000, scoped, tag = 'input window, operand 2, single buffered']
    #allocation6 [shape = 's32[1]{0}', space=sflag, size = 0x4, scoped, tag = 'scoped memory for tpu_custom_call.1']
    #allocation7 [shape = 'u8[65536]{0}', space=vmem, size = 0x10000, scoped, tag = 'input window, operand 4, single buffered']
    #allocation8 [shape = 'u8[8192]{0}', space=vmem, size = 0x2000, scoped, tag = 'output window, operand 0']
    %11 = vsyncpa [#allocation3], 0
    %12 = vsyncpa [#allocation6], 0
    %13 = vsyncpa [#allocation4], 0
    %s14 = scalar_lea.sflag [#allocation4], 1
    %15 = vsyncpa %s14, 0
    loop: start=0, step=1, limit=4
    $region2: #{tpu_custom_call.1} parent=1 // loop_pre_header
      _
    $region3: #{tpu_custom_call.1} parent=1 // loop_header
      %s17 = sphi 0, %s21
      %p18 = scmp.ge.s32.totalorder %s17, 4
      %s27 = sphi 0, %s29
      %s30 = sphi 0, %s27
      %s31 = sphi 0, %s30
      %s47 = sphi 0, %s31
      %s51 = sphi 0, %s51
      %s53 = sphi 0, %s51
      %s54 = sphi 0, %s53
      %s68 = sphi 0, %s54
      %s72 = sphi 0, %s72
      %s74 = sphi 0, %s72
      %s75 = sphi 0, %s74
      %s89 = sphi 0, %s75
      %s93 = sphi 0, %s93
      %s95 = sphi 0, %s93
      %s96 = sphi 0, %s95
      %s110 = sphi 0, %s96
      %s114 = sphi 0, %s114
      %s116 = sphi 0, %s114
      %s117 = sphi 0, %s116
      %s131 = sphi 0, %s117
      %s135 = sphi 0, %s135
      %s137 = sphi 0, %s135
      %s138 = sphi 0, %s137
      %s152 = sphi 0, %s138
      %s158 = sphi 0, %s160
      %s161 = sphi 0, %s158
      %s162 = sphi 0, %s161
      %s178 = sphi 0, %s162
    $region4: #{tpu_custom_call.1} parent=1 // loop_header_branch
      %20 = sbr.rel (%p18) target = $region8
    $region5: #{tpu_custom_call.1} parent=1 // loop_body
      %s22 = ssub.s32 %s17, 1
      %s23 = ssub.s32 %s17, 2
      %s24 = sadd.s32 %s17, 1
      %s25 = ssub.s32 %s17, %s24
      %p26 = scmp.eq.s32.totalorder %s25, 0
      %s28 = sadd.s32 %s27, 1
      %s29 = scalar_select %p26, %s27, %s28
      %p32 = pneg %p26
      %p33 = scmp.eq.s32.totalorder %s17, 1
      %p34 = por %p32, %p33
      %p35 = scmp.ne.s32.totalorder %s27, %s30
      %p36 = scmp.eq.s32.totalorder %s17, 0
      %p37 = por %p35, %p36
      %p38 = scmp.ne.s32.totalorder %s27, %s30
      %p39 = scmp.eq.s32.totalorder %s22, 1
      %p40 = por %p38, %p39
      %p41 = scmp.ne.s32.totalorder %s30, %s31
      %p42 = scmp.eq.s32.totalorder %s22, 0
      %p43 = por %p41, %p42
      %p44 = scmp.ne.s32.totalorder %s30, %s31
      %p45 = scmp.eq.s32.totalorder %s23, 1
      %p46 = por %p44, %p45
      %p48 = scmp.ne.s32.totalorder %s31, %s47
      %p49 = scmp.eq.s32.totalorder %s23, 0
      %p50 = por %p48, %p49
      %s52 = sadd.s32 %s51, 1
      %p55 = scmp.eq.s32.totalorder %s17, 1
      %p56 = scmp.ne.s32.totalorder %s51, %s53
      %p57 = scmp.eq.s32.totalorder %s17, 0
      %p58 = por %p56, %p57
      %p59 = scmp.ne.s32.totalorder %s51, %s53
      %p60 = scmp.eq.s32.totalorder %s22, 1
      %p61 = por %p59, %p60
      %p62 = scmp.ne.s32.totalorder %s53, %s54
      %p63 = scmp.eq.s32.totalorder %s22, 0
      %p64 = por %p62, %p63
      %p65 = scmp.ne.s32.totalorder %s53, %s54
      %p66 = scmp.eq.s32.totalorder %s23, 1
      %p67 = por %p65, %p66
      %p69 = scmp.ne.s32.totalorder %s54, %s68
      %p70 = scmp.eq.s32.totalorder %s23, 0
      %p71 = por %p69, %p70
      %s73 = sadd.s32 %s72, 1
      %p76 = scmp.eq.s32.totalorder %s17, 1
      %p77 = scmp.ne.s32.totalorder %s72, %s74
      %p78 = scmp.eq.s32.totalorder %s17, 0
      %p79 = por %p77, %p78
      %p80 = scmp.ne.s32.totalorder %s72, %s74
      %p81 = scmp.eq.s32.totalorder %s22, 1
      %p82 = por %p80, %p81
      %p83 = scmp.ne.s32.totalorder %s74, %s75
      %p84 = scmp.eq.s32.totalorder %s22, 0
      %p85 = por %p83, %p84
      %p86 = scmp.ne.s32.totalorder %s74, %s75
      %p87 = scmp.eq.s32.totalorder %s23, 1
      %p88 = por %p86, %p87
      %p90 = scmp.ne.s32.totalorder %s75, %s89
      %p91 = scmp.eq.s32.totalorder %s23, 0
      %p92 = por %p90, %p91
      %s94 = sadd.s32 %s93, 1
      %p97 = scmp.eq.s32.totalorder %s17, 1
      %p98 = scmp.ne.s32.totalorder %s93, %s95
      %p99 = scmp.eq.s32.totalorder %s17, 0
      %p100 = por %p98, %p99
      %p101 = scmp.ne.s32.totalorder %s93, %s95
      %p102 = scmp.eq.s32.totalorder %s22, 1
      %p103 = por %p101, %p102
      %p104 = scmp.ne.s32.totalorder %s95, %s96
      %p105 = scmp.eq.s32.totalorder %s22, 0
      %p106 = por %p104, %p105
      %p107 = scmp.ne.s32.totalorder %s95, %s96
      %p108 = scmp.eq.s32.totalorder %s23, 1
      %p109 = por %p107, %p108
      %p111 = scmp.ne.s32.totalorder %s96, %s110
      %p112 = scmp.eq.s32.totalorder %s23, 0
      %p113 = por %p111, %p112
      %s115 = sadd.s32 %s114, 1
      %p118 = scmp.eq.s32.totalorder %s17, 1
      %p119 = scmp.ne.s32.totalorder %s114, %s116
      %p120 = scmp.eq.s32.totalorder %s17, 0
      %p121 = por %p119, %p120
      %p122 = scmp.ne.s32.totalorder %s114, %s116
      %p123 = scmp.eq.s32.totalorder %s22, 1
      %p124 = por %p122, %p123
      %p125 = scmp.ne.s32.totalorder %s116, %s117
      %p126 = scmp.eq.s32.totalorder %s22, 0
      %p127 = por %p125, %p126
      %p128 = scmp.ne.s32.totalorder %s116, %s117
      %p129 = scmp.eq.s32.totalorder %s23, 1
      %p130 = por %p128, %p129
      %p132 = scmp.ne.s32.totalorder %s117, %s131
      %p133 = scmp.eq.s32.totalorder %s23, 0
      %p134 = por %p132, %p133
      %s136 = sadd.s32 %s135, 1
      %p139 = scmp.eq.s32.totalorder %s17, 1
      %p140 = scmp.ne.s32.totalorder %s135, %s137
      %p141 = scmp.eq.s32.totalorder %s17, 0
      %p142 = por %p140, %p141
      %p143 = scmp.ne.s32.totalorder %s135, %s137
      %p144 = scmp.eq.s32.totalorder %s22, 1
      %p145 = por %p143, %p144
      %p146 = scmp.ne.s32.totalorder %s137, %s138
      %p147 = scmp.eq.s32.totalorder %s22, 0
      %p148 = por %p146, %p147
      %p149 = scmp.ne.s32.totalorder %s137, %s138
      %p150 = scmp.eq.s32.totalorder %s23, 1
      %p151 = por %p149, %p150
      %p153 = scmp.ne.s32.totalorder %s138, %s152
      %p154 = scmp.eq.s32.totalorder %s23, 0
      %p155 = por %p153, %p154
      %s156 = ssub.s32 %s17, %s24
      %p157 = scmp.eq.s32.totalorder %s156, 0
      %s159 = sadd.s32 %s158, 1
      %s160 = scalar_select %p157, %s158, %s159
      %p163 = pneg %p157
      %p164 = scmp.eq.s32.totalorder %s17, 1
      %p165 = por %p163, %p164
      %p166 = scmp.ne.s32.totalorder %s158, %s161
      %p167 = scmp.eq.s32.totalorder %s17, 0
      %p168 = por %p166, %p167
      %p169 = scmp.ne.s32.totalorder %s158, %s161
      %p170 = scmp.eq.s32.totalorder %s22, 1
      %p171 = por %p169, %p170
      %p172 = scmp.ne.s32.totalorder %s161, %s162
      %p173 = scmp.eq.s32.totalorder %s22, 0
      %p174 = por %p172, %p173
      %p175 = scmp.ne.s32.totalorder %s161, %s162
      %p176 = scmp.eq.s32.totalorder %s23, 1
      %p177 = por %p175, %p176
      %p179 = scmp.ne.s32.totalorder %s162, %s178
      %p180 = scmp.eq.s32.totalorder %s23, 0
      %p181 = por %p179, %p180
      %p182 = scmp.le.s32.totalorder 1, %s17
      %p183 = scmp.lt.s32.totalorder %s17, 3
      %p184 = pnand %p182, %p183
      %p185 = pneg %p184
      // Predicated region
      $region9: #{tpu_custom_call.1} parent=5 // pred_check
        _
      $region10: #{tpu_custom_call.1} parent=5 // pred_check_branch
        %187 = sbr.rel (%p184) target = $region12
      $region11: #{tpu_custom_call.1} parent=5 // pred_region
        %s188 = ssub.s32 %s17, 1
        // Predicated region
        $region13: #{tpu_custom_call.1} parent=11 // pred_check
          %p189 = pneg %p64
        $region14: #{tpu_custom_call.1} parent=11 // pred_check_branch
          %191 = sbr.rel (%p189) target = $region16
        $region15: #{tpu_custom_call.1} parent=11 // pred_region
          %s193 = ssub.s32 2048, 2048
          %194 = vsyncadd [#allocation3], %s193
          %s195 = sshll.u32 [#allocation2], 4
          %s196 = int_to_ptr.vmem [resolvable:$true] %s195
          %201 = dma.hbm_to_vmem [thread:$0]  %s1, 2048, %s196, [#allocation3], 128, 128, 8
        $region16: #{tpu_custom_call.1} parent=11 // pred_fallthru
          _
        // Predicated region
        $region17: #{tpu_custom_call.1} parent=11 // pred_check
          %p202 = pneg %p85
        $region18: #{tpu_custom_call.1} parent=11 // pred_check_branch
          %204 = sbr.rel (%p202) target = $region20
        $region19: #{tpu_custom_call.1} parent=11 // pred_region
          %s206 = ssub.s32 2048, 2048
          %207 = vsyncadd [#allocation6], %s206
          %s208 = sshll.u32 [#allocation5], 4
          %s209 = int_to_ptr.vmem [resolvable:$true] %s208
          %214 = dma.hbm_to_vmem [thread:$0]  %s2, 2048, %s209, [#allocation6], 128, 128, 8
        $region20: #{tpu_custom_call.1} parent=11 // pred_fallthru
          _
        // Predicated region
        $region21: #{tpu_custom_call.1} parent=11 // pred_check
          %p215 = pneg %p106
        $region22: #{tpu_custom_call.1} parent=11 // pred_check_branch
          %217 = sbr.rel (%p215) target = $region24
        $region23: #{tpu_custom_call.1} parent=11 // pred_region
          _
        $region24: #{tpu_custom_call.1} parent=11 // pred_fallthru
          _
        // Predicated region
        $region25: #{tpu_custom_call.1} parent=11 // pred_check
          %p218 = pneg %p127
        $region26: #{tpu_custom_call.1} parent=11 // pred_check_branch
          %220 = sbr.rel (%p218) target = $region28
        $region27: #{tpu_custom_call.1} parent=11 // pred_region
          %s222 = ssub.s32 2048, 2048
          %223 = vsyncadd [#allocation6], %s222
          %s224 = sshll.u32 [#allocation7], 4
          %s225 = int_to_ptr.vmem [resolvable:$true] %s224
          %230 = dma.hbm_to_vmem [thread:$0]  %s4, 2048, %s225, [#allocation6], 128, 128, 8
        $region28: #{tpu_custom_call.1} parent=11 // pred_fallthru
          _
        // Predicated region
        $region29: #{tpu_custom_call.1} parent=11 // pred_check
          %p231 = pneg %p148
        $region30: #{tpu_custom_call.1} parent=11 // pred_check_branch
          %233 = sbr.rel (%p231) target = $region32
        $region31: #{tpu_custom_call.1} parent=11 // pred_region
          _
        $region32: #{tpu_custom_call.1} parent=11 // pred_fallthru
          _
      $region12: #{tpu_custom_call.1} parent=5 // pred_fallthru
        _
      %p234 = scmp.lt.s32.totalorder %s17, 2
      // Predicated region
      $region33: #{tpu_custom_call.1} parent=5 // pred_check
        %p235 = pneg %p234
      $region34: #{tpu_custom_call.1} parent=5 // pred_check_branch
        %237 = sbr.rel (%p235) target = $region36
      $region35: #{tpu_custom_call.1} parent=5 // pred_region
        // Predicated region
        $region37: #{tpu_custom_call.1} parent=35 // pred_check
          %p238 = pneg %p37
        $region38: #{tpu_custom_call.1} parent=35 // pred_check_branch
          %240 = sbr.rel (%p238) target = $region40
        $region39: #{tpu_custom_call.1} parent=35 // pred_region
          %p241 = scmp.lt.s32.totalorder %s17, 1
          %s242 = scalar_select %p241, %s17, 1
          %s243 = smul.addr %s242, 8
          %s244 = scalar_lea.vmem %s0, %s243
        $region40: #{tpu_custom_call.1} parent=35 // pred_fallthru
          _
      $region36: #{tpu_custom_call.1} parent=5 // pred_fallthru
        _
      %p245 = scmp.le.s32.totalorder 1, %s17
      %p246 = scmp.lt.s32.totalorder %s17, 3
      %p247 = pnand %p245, %p246
      %p248 = pneg %p247
      // Predicated region
      $region41: #{tpu_custom_call.1} parent=5 // pred_check
        _
      $region42: #{tpu_custom_call.1} parent=5 // pred_check_branch
        %250 = sbr.rel (%p247) target = $region44
      $region43: #{tpu_custom_call.1} parent=5 // pred_region
        %s251 = ssub.s32 %s17, 1
        // Predicated region
        $region45: #{tpu_custom_call.1} parent=43 // pred_check
          %p252 = pneg %p64
        $region46: #{tpu_custom_call.1} parent=43 // pred_check_branch
          %254 = sbr.rel (%p252) target = $region48
        $region47: #{tpu_custom_call.1} parent=43 // pred_region
          %255 = dma.done [#allocation3], 2048
        $region48: #{tpu_custom_call.1} parent=43 // pred_fallthru
          _
        // Predicated region
        $region49: #{tpu_custom_call.1} parent=43 // pred_check
          %p256 = pneg %p85
        $region50: #{tpu_custom_call.1} parent=43 // pred_check_branch
          %258 = sbr.rel (%p256) target = $region52
        $region51: #{tpu_custom_call.1} parent=43 // pred_region
          %259 = dma.done [#allocation6], 2048
        $region52: #{tpu_custom_call.1} parent=43 // pred_fallthru
          _
        // Predicated region
        $region53: #{tpu_custom_call.1} parent=43 // pred_check
          %p260 = pneg %p127
        $region54: #{tpu_custom_call.1} parent=43 // pred_check_branch
          %262 = sbr.rel (%p260) target = $region56
        $region55: #{tpu_custom_call.1} parent=43 // pred_region
          %263 = dma.done [#allocation6], 2048
        $region56: #{tpu_custom_call.1} parent=43 // pred_fallthru
          _
        %p264 = scmp.lt.s32.totalorder %s22, 1
        %s265 = scalar_select %p264, %s22, 1
        %s266 = smul.addr %s265, 8
        %s267 = scalar_lea.vmem %s0, %s266
        %p268 = pneg %p43
        %p269 = pneg %p40
        %p270 = pneg %p64
        %p271 = pneg %p61
        %p272 = pneg %p85
        %p273 = pneg %p82
        %p274 = pneg %p106
        %p275 = pneg %p103
        %p276 = pneg %p127
        %p277 = pneg %p124
        %p278 = pneg %p148
        %p279 = pneg %p145
        %p280 = pneg %p174
        %p281 = pneg %p171
        %s282 = sand.u32 %s161, 1
        %s283 = scalar_lea.sflag [#allocation4], %s282
        %s284 = sand.u32 %s161, 1
        %s285 = smul.addr %s284, 8
        %s286 = scalar_lea.vmem [#allocation8], %s285
        %p287 = scmp.lt.s32.totalorder %s22, 1
        %s288 = scalar_select %p287, %s22, 1
        %s289 = smul.addr %s288, 8
        %s290 = scalar_lea.vmem %s0, %s289
        %v291 = vld [vmem:[%s290] sm:$0xff]
        %v292 = vlaneseq
        %v293 = vand.u32 %v292, 127
        %294 = vset.pattern.permute.xlu0 0
        %295 = vperm.xlu0 %294, %v291
        %v296 = vpop.permute.xlu0 %295
        %vm297 = vcmp.eq.s32.totalorder %v293, %v296
        %v298 = vsel %vm297, 1, 0
        %v299 = vcvt.s32.f32 %v298
        %v300 = vld [vmem:[#allocation2] sm:$0xff]
        %v301 = vld [vmem:[#allocation2 + $0x8] sm:$0xff]
        %v302 = vld [vmem:[#allocation2 + $0x10] sm:$0xff]
        %v303 = vld [vmem:[#allocation2 + $0x18] sm:$0xff]
        %v304 = vld [vmem:[#allocation2 + $0x20] sm:$0xff]
        %v305 = vld [vmem:[#allocation2 + $0x28] sm:$0xff]
        %v306 = vld [vmem:[#allocation2 + $0x30] sm:$0xff]
        %v307 = vld [vmem:[#allocation2 + $0x38] sm:$0xff]
        %v308 = vld [vmem:[#allocation2 + $0x40] sm:$0xff]
        %v309 = vld [vmem:[#allocation2 + $0x48] sm:$0xff]
        %v310 = vld [vmem:[#allocation2 + $0x50] sm:$0xff]
        %v311 = vld [vmem:[#allocation2 + $0x58] sm:$0xff]
        %v312 = vld [vmem:[#allocation2 + $0x60] sm:$0xff]
        %v313 = vld [vmem:[#allocation2 + $0x68] sm:$0xff]
        %v314 = vld [vmem:[#allocation2 + $0x70] sm:$0xff]
        %v315 = vld [vmem:[#allocation2 + $0x78] sm:$0xff]
        %316 = vmatprep.subr.mxu0 0.0
        %317 = vmatpush1.msra.mxu0 %v315
        %318 = vmatprep.subr.mxu0 0.0
        %319 = vmatpush1.msra.mxu0 %v314
        %320 = vmatprep.subr.mxu0 0.0
        %321 = vmatpush1.msra.mxu0 %v313
        %322 = vmatprep.subr.mxu0 0.0
        %323 = vmatpush1.msra.mxu0 %v312
        %324 = vmatprep.subr.mxu0 0.0
        %325 = vmatpush1.msra.mxu0 %v311
        %326 = vmatprep.subr.mxu0 0.0
        %327 = vmatpush1.msra.mxu0 %v310
        %328 = vmatprep.subr.mxu0 0.0
        %329 = vmatpush1.msra.mxu0 %v309
        %330 = vmatprep.subr.mxu0 0.0
        %331 = vmatpush1.msra.mxu0 %v308
        %332 = vmatprep.subr.mxu0 0.0
        %333 = vmatpush1.msra.mxu0 %v307
        %334 = vmatprep.subr.mxu0 0.0
        %335 = vmatpush1.msra.mxu0 %v306
        %336 = vmatprep.subr.mxu0 0.0
        %337 = vmatpush1.msra.mxu0 %v305
        %338 = vmatprep.subr.mxu0 0.0
        %339 = vmatpush1.msra.mxu0 %v304
        %340 = vmatprep.subr.mxu0 0.0
        %341 = vmatpush1.msra.mxu0 %v303
        %342 = vmatprep.subr.mxu0 0.0
        %343 = vmatpush1.msra.mxu0 %v302
        %344 = vmatprep.subr.mxu0 0.0
        %345 = vmatpush1.msra.mxu0 %v301
        %346 = vmatprep.subr.mxu0 0.0
        %347 = vmatpush1.msra.mxu0 %v300
        %348 = vmatprep.subr.mxu0 0.0
        %349 = vmatpush2.msra.mxu0 0.0
        %350 = vmatprep.subr.mxu0 0.0
        %351 = vmatpush2.msra.mxu0 0.0
        %352 = vmatprep.subr.mxu0 0.0
        %353 = vmatpush2.msra.mxu0 0.0
        %354 = vmatprep.subr.mxu0 0.0
        %355 = vmatpush2.msra.mxu0 0.0
        %356 = vmatprep.subr.mxu0 0.0
        %357 = vmatpush2.msra.mxu0 0.0
        %358 = vmatprep.subr.mxu0 0.0
        %359 = vmatpush2.msra.mxu0 0.0
        %360 = vmatprep.subr.mxu0 0.0
        %361 = vmatpush2.msra.mxu0 0.0
        %362 = vmatprep.subr.mxu0 0.0
        %363 = vmatpush2.msra.mxu0 0.0
        %364 = vmatprep.subr.mxu0 0.0
        %365 = vmatpush2.msra.mxu0 0.0
        %366 = vmatprep.subr.mxu0 0.0
        %367 = vmatpush2.msra.mxu0 0.0
        %368 = vmatprep.subr.mxu0 0.0
        %369 = vmatpush2.msra.mxu0 0.0
        %370 = vmatprep.subr.mxu0 0.0
        %371 = vmatpush2.msra.mxu0 0.0
        %372 = vmatprep.subr.mxu0 0.0
        %373 = vmatpush2.msra.mxu0 0.0
        %374 = vmatprep.subr.mxu0 0.0
        %375 = vmatpush2.msra.mxu0 0.0
        %376 = vmatprep.subr.mxu0 0.0
        %377 = vmatpush2.msra.mxu0 0.0
        %378 = vmatprep.subr.mxu0 0.0
        %379 = vmatpush2.msra.mxu0 0.0
        %380 = vmatprep.mubr.f32.mxu0 0.0
        %381 = vmatmul.mubr.f32.gmra.mxu0 %v299
        %v382 = vpop.f32.mrf.mxu0
        %v383 = vadd.f32 0.0, %v382
        %v384 = vpop.f32.mrf.mxu0
        %385 = vdwg.mxu0
        %v386 = vld [vmem:[#allocation5] sm:$0xff]
        %v387 = vld [vmem:[#allocation5 + $0x8] sm:$0xff]
        %v388 = vld [vmem:[#allocation5 + $0x10] sm:$0xff]
        %v389 = vld [vmem:[#allocation5 + $0x18] sm:$0xff]
        %v390 = vld [vmem:[#allocation5 + $0x20] sm:$0xff]
        %v391 = vld [vmem:[#allocation5 + $0x28] sm:$0xff]
        %v392 = vld [vmem:[#allocation5 + $0x30] sm:$0xff]
        %v393 = vld [vmem:[#allocation5 + $0x38] sm:$0xff]
        %v394 = vld [vmem:[#allocation5 + $0x40] sm:$0xff]
        %v395 = vld [vmem:[#allocation5 + $0x48] sm:$0xff]
        %v396 = vld [vmem:[#allocation5 + $0x50] sm:$0xff]
        %v397 = vld [vmem:[#allocation5 + $0x58] sm:$0xff]
        %v398 = vld [vmem:[#allocation5 + $0x60] sm:$0xff]
        %v399 = vld [vmem:[#allocation5 + $0x68] sm:$0xff]
        %v400 = vld [vmem:[#allocation5 + $0x70] sm:$0xff]
        %v401 = vld [vmem:[#allocation5 + $0x78] sm:$0xff]
        %v402 = vld [vmem:[%s3] sm:$0x1]
        %v404 = vlaneseq
        %v405 = vshrl.u32 %v404, 7
        %v406 = vsub.s32 0, %v405
        %v407 = vrot.slane %v402, %v406
        %409 = vmatprep.subr.mxu0 0.0
        %410 = vmatpush1.msra.mxu0 %v401
        %411 = vmatprep.subr.mxu0 0.0
        %412 = vmatpush1.msra.mxu0 %v400
        %413 = vmatprep.subr.mxu0 0.0
        %414 = vmatpush1.msra.mxu0 %v399
        %415 = vmatprep.subr.mxu0 0.0
        %416 = vmatpush1.msra.mxu0 %v398
        %417 = vmatprep.subr.mxu0 0.0
        %418 = vmatpush1.msra.mxu0 %v397
        %419 = vmatprep.subr.mxu0 0.0
        %420 = vmatpush1.msra.mxu0 %v396
        %421 = vmatprep.subr.mxu0 0.0
        %422 = vmatpush1.msra.mxu0 %v395
        %423 = vmatprep.subr.mxu0 0.0
        %424 = vmatpush1.msra.mxu0 %v394
        %425 = vmatprep.subr.mxu0 0.0
        %426 = vmatpush1.msra.mxu0 %v393
        %427 = vmatprep.subr.mxu0 0.0
        %428 = vmatpush1.msra.mxu0 %v392
        %429 = vmatprep.subr.mxu0 0.0
        %430 = vmatpush1.msra.mxu0 %v391
        %431 = vmatprep.subr.mxu0 0.0
        %432 = vmatpush1.msra.mxu0 %v390
        %433 = vmatprep.subr.mxu0 0.0
        %434 = vmatpush1.msra.mxu0 %v389
        %435 = vmatprep.subr.mxu0 0.0
        %436 = vmatpush1.msra.mxu0 %v388
        %437 = vmatprep.subr.mxu0 0.0
        %438 = vmatpush1.msra.mxu0 %v387
        %439 = vmatprep.subr.mxu0 0.0
        %440 = vmatpush1.msra.mxu0 %v386
        %441 = vmatprep.subr.mxu0 0.0
        %442 = vmatpush2.msra.mxu0 0.0
        %443 = vmatprep.subr.mxu0 0.0
        %444 = vmatpush2.msra.mxu0 0.0
        %445 = vmatprep.subr.mxu0 0.0
        %446 = vmatpush2.msra.mxu0 0.0
        %447 = vmatprep.subr.mxu0 0.0
        %448 = vmatpush2.msra.mxu0 0.0
        %449 = vmatprep.subr.mxu0 0.0
        %450 = vmatpush2.msra.mxu0 0.0
        %451 = vmatprep.subr.mxu0 0.0
        %452 = vmatpush2.msra.mxu0 0.0
        %453 = vmatprep.subr.mxu0 0.0
        %454 = vmatpush2.msra.mxu0 0.0
        %455 = vmatprep.subr.mxu0 0.0
        %456 = vmatpush2.msra.mxu0 0.0
        %457 = vmatprep.subr.mxu0 0.0
        %458 = vmatpush2.msra.mxu0 0.0
        %459 = vmatprep.subr.mxu0 0.0
        %460 = vmatpush2.msra.mxu0 0.0
        %461 = vmatprep.subr.mxu0 0.0
        %462 = vmatpush2.msra.mxu0 0.0
        %463 = vmatprep.subr.mxu0 0.0
        %464 = vmatpush2.msra.mxu0 0.0
        %465 = vmatprep.subr.mxu0 0.0
        %466 = vmatpush2.msra.mxu0 0.0
        %467 = vmatprep.subr.mxu0 0.0
        %468 = vmatpush2.msra.mxu0 0.0
        %469 = vmatprep.subr.mxu0 0.0
        %470 = vmatpush2.msra.mxu0 0.0
        %471 = vmatprep.subr.mxu0 0.0
        %472 = vmatpush2.msra.mxu0 0.0
        %473 = vmatprep.mubr.f32.mxu0 0.0
        %474 = vmatmul.mubr.f32.gmra.mxu0 %v383
        %v475 = vpop.f32.mrf.mxu0
        %v476 = vadd.f32 %v407, %v475
        %v477 = vpop.f32.mrf.mxu0
        %478 = vdwg.mxu0
        %v479 = vmax.f32 %v476, 0.0
        %v480 = vld [vmem:[#allocation7] sm:$0xff]
        %v481 = vld [vmem:[#allocation7 + $0x8] sm:$0xff]
        %v482 = vld [vmem:[#allocation7 + $0x10] sm:$0xff]
        %v483 = vld [vmem:[#allocation7 + $0x18] sm:$0xff]
        %v484 = vld [vmem:[#allocation7 + $0x20] sm:$0xff]
        %v485 = vld [vmem:[#allocation7 + $0x28] sm:$0xff]
        %v486 = vld [vmem:[#allocation7 + $0x30] sm:$0xff]
        %v487 = vld [vmem:[#allocation7 + $0x38] sm:$0xff]
        %v488 = vld [vmem:[#allocation7 + $0x40] sm:$0xff]
        %v489 = vld [vmem:[#allocation7 + $0x48] sm:$0xff]
        %v490 = vld [vmem:[#allocation7 + $0x50] sm:$0xff]
        %v491 = vld [vmem:[#allocation7 + $0x58] sm:$0xff]
        %v492 = vld [vmem:[#allocation7 + $0x60] sm:$0xff]
        %v493 = vld [vmem:[#allocation7 + $0x68] sm:$0xff]
        %v494 = vld [vmem:[#allocation7 + $0x70] sm:$0xff]
        %v495 = vld [vmem:[#allocation7 + $0x78] sm:$0xff]
        %v496 = vld [vmem:[%s5] sm:$0x1]
        %v498 = vlaneseq
        %v499 = vshrl.u32 %v498, 7
        %v500 = vsub.s32 0, %v499
        %v501 = vrot.slane %v496, %v500
        %503 = vmatprep.subr.mxu0 0.0
        %504 = vmatpush1.msra.mxu0 %v495
        %505 = vmatprep.subr.mxu0 0.0
        %506 = vmatpush1.msra.mxu0 %v494
        %507 = vmatprep.subr.mxu0 0.0
        %508 = vmatpush1.msra.mxu0 %v493
        %509 = vmatprep.subr.mxu0 0.0
        %510 = vmatpush1.msra.mxu0 %v492
        %511 = vmatprep.subr.mxu0 0.0
        %512 = vmatpush1.msra.mxu0 %v491
        %513 = vmatprep.subr.mxu0 0.0
        %514 = vmatpush1.msra.mxu0 %v490
        %515 = vmatprep.subr.mxu0 0.0
        %516 = vmatpush1.msra.mxu0 %v489
        %517 = vmatprep.subr.mxu0 0.0
        %518 = vmatpush1.msra.mxu0 %v488
        %519 = vmatprep.subr.mxu0 0.0
        %520 = vmatpush1.msra.mxu0 %v487
        %521 = vmatprep.subr.mxu0 0.0
        %522 = vmatpush1.msra.mxu0 %v486
        %523 = vmatprep.subr.mxu0 0.0
        %524 = vmatpush1.msra.mxu0 %v485
        %525 = vmatprep.subr.mxu0 0.0
        %526 = vmatpush1.msra.mxu0 %v484
        %527 = vmatprep.subr.mxu0 0.0
        %528 = vmatpush1.msra.mxu0 %v483
        %529 = vmatprep.subr.mxu0 0.0
        %530 = vmatpush1.msra.mxu0 %v482
        %531 = vmatprep.subr.mxu0 0.0
        %532 = vmatpush1.msra.mxu0 %v481
        %533 = vmatprep.subr.mxu0 0.0
        %534 = vmatpush1.msra.mxu0 %v480
        %535 = vmatprep.subr.mxu0 0.0
        %536 = vmatpush2.msra.mxu0 0.0
        %537 = vmatprep.subr.mxu0 0.0
        %538 = vmatpush2.msra.mxu0 0.0
        %539 = vmatprep.subr.mxu0 0.0
        %540 = vmatpush2.msra.mxu0 0.0
        %541 = vmatprep.subr.mxu0 0.0
        %542 = vmatpush2.msra.mxu0 0.0
        %543 = vmatprep.subr.mxu0 0.0
        %544 = vmatpush2.msra.mxu0 0.0
        %545 = vmatprep.subr.mxu0 0.0
        %546 = vmatpush2.msra.mxu0 0.0
        %547 = vmatprep.subr.mxu0 0.0
        %548 = vmatpush2.msra.mxu0 0.0
        %549 = vmatprep.subr.mxu0 0.0
        %550 = vmatpush2.msra.mxu0 0.0
        %551 = vmatprep.subr.mxu0 0.0
        %552 = vmatpush2.msra.mxu0 0.0
        %553 = vmatprep.subr.mxu0 0.0
        %554 = vmatpush2.msra.mxu0 0.0
        %555 = vmatprep.subr.mxu0 0.0
        %556 = vmatpush2.msra.mxu0 0.0
        %557 = vmatprep.subr.mxu0 0.0
        %558 = vmatpush2.msra.mxu0 0.0
        %559 = vmatprep.subr.mxu0 0.0
        %560 = vmatpush2.msra.mxu0 0.0
        %561 = vmatprep.subr.mxu0 0.0
        %562 = vmatpush2.msra.mxu0 0.0
        %563 = vmatprep.subr.mxu0 0.0
        %564 = vmatpush2.msra.mxu0 0.0
        %565 = vmatprep.subr.mxu0 0.0
        %566 = vmatpush2.msra.mxu0 0.0
        %567 = vmatprep.mubr.f32.mxu0 0.0
        %568 = vmatmul.mubr.f32.gmra.mxu0 %v479
        %v569 = vpop.f32.mrf.mxu0
        %v570 = vadd.f32 %v501, %v569
        %v571 = vpop.f32.mrf.mxu0
        %572 = vdwg.mxu0
        %v573 = vlaneseq
        %v574 = vshrl.u32 %v573, 7
        %vm575 = vcmp.lt.s32.totalorder %v574, 4
        %v576 = vsel %vm575, %v570, -inf
        %v577 = vrot.slane %v576, 4
        %v578 = vmax.f32 %v576, %v577
        %v579 = vrot.slane %v578, 2
        %v580 = vmax.f32 %v578, %v579
        %v581 = vrot.slane %v580, 1
        %v582 = vmax.f32 %v580, %v581
        %v583 = vsub.f32 %v570, %v582
        %v584 = vmul.f32 %v583, 1.442695
        %v585 = vpow.pop %v584
        %v586 = vsel %vm575, %v585, 0.0
        %v587 = vrot.slane %v586, 4
        %v588 = vadd.f32 %v586, %v587
        %v589 = vrot.slane %v588, 2
        %v590 = vadd.f32 %v588, %v589
        %v591 = vrot.slane %v590, 1
        %v592 = vadd.f32 %v590, %v591
        %v593 = vrcp.pop %v592
        %v594 = vmul.f32 %v586, %v593
        %595 = vst [vmem:[%s286] sm:$0xff] %v594
        %s596 = sand.u32 %s161, 1
        %s597 = scalar_lea.sflag [#allocation4], %s596
        %s598 = sand.u32 %s161, 1
        %s599 = smul.addr %s598, 8
        %s600 = scalar_lea.vmem [#allocation8], %s599
        // Predicated region
        $region57: #{tpu_custom_call.1} parent=43 // pred_check
          %p601 = pneg %p171
        $region58: #{tpu_custom_call.1} parent=43 // pred_check_branch
          %603 = sbr.rel (%p601) target = $region60
        $region59: #{tpu_custom_call.1} parent=43 // pred_region
          %s605 = ssub.s32 128, 128
          %606 = vsyncadd %s597, %s605
          %s607 = smul.addr %s22, 128
          %s608 = scalar_lea.hbm %s6, %s607
          %s610 = sshll.u32 %s600, 4
          %s611 = int_to_ptr.vmem [resolvable:$true] %s610
          %613 = dma.vmem_to_hbm [thread:$0]  %s611, 128, %s608, %s597
        $region60: #{tpu_custom_call.1} parent=43 // pred_fallthru
          _
      $region44: #{tpu_custom_call.1} parent=5 // pred_fallthru
        _
      %p614 = scmp.le.s32.totalorder 2, %s17
      // Predicated region
      $region61: #{tpu_custom_call.1} parent=5 // pred_check
        %p615 = pneg %p614
      $region62: #{tpu_custom_call.1} parent=5 // pred_check_branch
        %617 = sbr.rel (%p615) target = $region64
      $region63: #{tpu_custom_call.1} parent=5 // pred_region
        %s618 = ssub.s32 %s17, 2
        // Predicated region
        $region65: #{tpu_custom_call.1} parent=63 // pred_check
          %p619 = pneg %p177
        $region66: #{tpu_custom_call.1} parent=63 // pred_check_branch
          %621 = sbr.rel (%p619) target = $region68
        $region67: #{tpu_custom_call.1} parent=63 // pred_region
          %s622 = sand.u32 %s162, 1
          %s623 = scalar_lea.sflag [#allocation4], %s622
          %s624 = sand.u32 %s162, 1
          %s625 = smul.addr %s624, 8
          %s626 = scalar_lea.vmem [#allocation8], %s625
          %627 = dma.done %s623, 128
        $region68: #{tpu_custom_call.1} parent=63 // pred_fallthru
          _
      $region64: #{tpu_custom_call.1} parent=5 // pred_fallthru
        _
    $region6: #{tpu_custom_call.1} parent=1 // loop_footer
      %s21 = sadd.s32 1, %s17
    $region7: #{tpu_custom_call.1} parent=1 // loop_footer_branch
      %16 = sbr.rel target = $region3
    $region8: #{tpu_custom_call.1} parent=1 // loop_exit
      _
    %628 = vsyncpa [#allocation3], 1
    %s629 = scalar_lea.sflag [#allocation3], 1
    %630 = vsyncpa %s629, 1
    %631 = vsyncpa [#allocation6], 1
    %632 = vsyncpa [#allocation4], 1
    %s633 = scalar_lea.sflag [#allocation4], 1
    %634 = vsyncpa %s633, 1

</llo_original>
